<compile_context>
chip_gen: v6e
topology: v6e:2x2x1
jax: 0.10.0
libtpu: 0.0.40
codegen_flags: <defaults>
</compile_context>

<pallas_src>
import jax
import jax.numpy as jnp
from jax.experimental import pallas as pl
from jax.experimental.pallas import tpu as pltpu

LANES = 128
# 4096 rows x 128 lanes x 4 B = 2 MiB per f32 block. Double-buffered in + out
# = 8 MiB, comfortably inside default scoped VMEM on v5e (16 MiB) and v6e/v7x
# (32 MiB). (v7x could go to 8192-row / 4 MiB blocks with an explicit
# vmem_limit_bytes; 2 MiB is the safe all-generation choice.)
TILE_ROWS = 4096
MIN_MULTIBLOCK_ROWS = 256  # below this a single full-array block is fine


def _round_up(v, m):
    return ((v + m - 1) // m) * m


def _alpha_sigmoid_kernel(params_ref, x_ref, o_ref):
    # params_ref: SMEM f32[5] = [alpha, beta, |gamma|, 1/(|delta|+1e-7), 0^|gamma|]
    alpha = params_ref[0]
    beta = params_ref[1]
    abs_gamma = params_ref[2]
    inv_delta = params_ref[3]
    zero_pow = params_ref[4]  # torch.pow(0, |gamma|): 1.0 if gamma == 0 else 0.0

    x = x_ref[...].astype(jnp.float32)

    abs_bx = jnp.abs(beta * x)

    # |beta*x|^|gamma| via exp/log (base >= 0). Guard base == 0 so we never hit
    # log(0) and still match torch.pow semantics (pow(0,0)=1, pow(0,g>0)=0).
    is_zero = abs_bx == 0.0
    safe_base = jnp.where(is_zero, 1.0, abs_bx)
    pow_gamma = jnp.where(is_zero, zero_pow, jnp.exp(abs_gamma * jnp.log(safe_base)))

    # (1 + pow_gamma)^inv_delta via log1p/exp (base >= 1, strictly positive).
    denom = jnp.exp(inv_delta * jnp.log1p(pow_gamma)) + 1e-07

    # EUP approx reciprocal + one Newton-Raphson step (~f32 accuracy) instead
    # of an exact divide's full VALU refinement chain.
    r = pl.reciprocal(denom, approx=True)
    r = r * (2.0 - denom * r)

    o_ref[...] = (alpha * x * r).astype(o_ref.dtype)


def _run_pallas(x2d, params, orig_dtype):
    rows = x2d.shape[0]

    if rows <= MIN_MULTIBLOCK_ROWS:
        # Tiny input: one full-array block (block == array dims is always legal).
        tile_rows = rows
    else:
        # Guarantee >= 4 grid steps so load/compute/store overlap (and so the
        # grid can shard across both TensorCores on v7x), capped at 2 MiB
        # blocks; keep the sublane dim a multiple of 8.
        tile_rows = min(TILE_ROWS, _round_up(pl.cdiv(rows, 4), 8))
    grid = (pl.cdiv(rows, tile_rows),)

    itemsize = jnp.dtype(orig_dtype).itemsize
    n_elems = rows * LANES
    cost = pl.CostEstimate(
        flops=10 * n_elems,
        transcendentals=5 * n_elems,            # log, exp, log1p, exp, recip
        bytes_accessed=2 * n_elems * itemsize,  # read x + write out
    )

    return pl.pallas_call(
        _alpha_sigmoid_kernel,
        out_shape=jax.ShapeDtypeStruct((rows, LANES), orig_dtype),
        grid=grid,
        in_specs=[
            pl.BlockSpec(memory_space=pltpu.SMEM),               # scalar params
            pl.BlockSpec((tile_rows, LANES), lambda i: (i, 0)),  # x tile
        ],
        out_specs=pl.BlockSpec((tile_rows, LANES), lambda i: (i, 0)),
        compiler_params=pltpu.CompilerParams(
            dimension_semantics=("parallel",),  # shards grid across TCs on v7x
        ),
        cost_estimate=cost,
    )(params, x2d)


def generalized_alpha_sigmoid(x, alpha, beta, gamma, delta):
    """f(x) = alpha*x / ((1 + |beta*x|^|gamma|)^(1/(|delta|+1e-7)) + 1e-7)."""
    orig_shape = x.shape
    orig_dtype = x.dtype

    # Hoist scalar prework out of the kernel (computed once, lives in SMEM).
    alpha_s = jnp.asarray(alpha, jnp.float32).reshape(())
    beta_s = jnp.asarray(beta, jnp.float32).reshape(())
    abs_gamma = jnp.abs(jnp.asarray(gamma, jnp.float32).reshape(()))
    inv_delta = 1.0 / (jnp.abs(jnp.asarray(delta, jnp.float32).reshape(())) + 1e-07)
    zero_pow = jnp.where(abs_gamma == 0.0, 1.0, 0.0).astype(jnp.float32)
    params = jnp.stack([alpha_s, beta_s, abs_gamma, inv_delta, zero_pow])

    flat = x.reshape(-1)
    n = flat.shape[0]
    n_main = (n // LANES) * LANES  # lane-aligned prefix length

    pieces = []
    if n_main > 0:
        x2d = flat[:n_main].reshape(-1, LANES)  # lane-dense slab
        out2d = _run_pallas(x2d, params, orig_dtype)
        pieces.append(out2d.reshape(-1))
    if n_main < n:
        # <=127-element tail in plain JAX: avoids the whole-array pad/unpad
        # HBM passes the previous version paid when n % 128 != 0.
        tail = flat[n_main:].astype(jnp.float32)
        abs_bx = jnp.abs(beta_s * tail)
        powg = jnp.power(abs_bx, abs_gamma)
        den = jnp.power(1.0 + powg, inv_delta)
        pieces.append((alpha_s * tail / (den + 1e-07)).astype(orig_dtype))

    out_flat = pieces[0] if len(pieces) == 1 else jnp.concatenate(pieces)
    return out_flat.reshape(orig_shape)


class GeneralizedAlphaSigmoid:
    """JAX/Pallas port of GeneralizedAlphaSigmoidTorch (deterministic init)."""

    def __init__(self):
        # Matches nn.Parameter(torch.ones(1)) for all four parameters.
        self.alpha = jnp.ones((1,), dtype=jnp.float32)
        self.beta = jnp.ones((1,), dtype=jnp.float32)
        self.gamma = jnp.ones((1,), dtype=jnp.float32)
        self.delta = jnp.ones((1,), dtype=jnp.float32)

    def __call__(self, x):
        return generalized_alpha_sigmoid(
            x, self.alpha, self.beta, self.gamma, self.delta
        )


if __name__ == "__main__":
    key = jax.random.PRNGKey(0)
    # NCHW input, small shapes
    x = jax.random.normal(key, (2, 4, 16, 16), dtype=jnp.float32)

    module = GeneralizedAlphaSigmoid()
    out = module(x)
    out = jax.block_until_ready(out)

    # Reference check in plain JAX (same formula as the PyTorch module).
    abs_beta_x = jnp.abs(module.beta * x)
    pow_gamma = jnp.power(abs_beta_x, jnp.abs(module.gamma))
    denom_base = 1.0 + pow_gamma
    inv_delta = 1.0 / (jnp.abs(module.delta) + 1e-07)
    denom = jnp.power(denom_base, inv_delta)
    ref = module.alpha * x / (denom + 1e-07)

    assert out.shape == x.shape
    assert jnp.allclose(out, ref, atol=1e-5, rtol=1e-5)

    print("KERNEL_OK")
</pallas_src>

<mosaic_0001>
module attributes {stable_mosaic.version = 11 : i64} {
  func.func @_alpha_sigmoid_kernel(%arg0: i32, %arg1: memref<5xf32, #tpu.memory_space<smem>>, %arg2: memref<16x128xf32, #tpu.memory_space<vmem>>, %arg3: memref<16x128xf32, #tpu.memory_space<vmem>>) attributes {dimension_semantics = [#tpu.dimension_semantics<parallel>], iteration_bounds = array<i64: 1>, scalar_prefetch = 0 : i64, scratch_operands = 0 : i64, tpu.core_type = #tpu.core_type<tc>, window_params = [{transform_indices = @transform_0, window_bounds = array<i64: 5>}, {transform_indices = @transform_1, window_bounds = array<i64: 16, 128>}, {transform_indices = @transform_2, window_bounds = array<i64: 16, 128>}]} {
    %c0 = arith.constant 0 : index
    %0 = memref.load %arg1[%c0] : memref<5xf32, #tpu.memory_space<smem>>
    %c1 = arith.constant 1 : index
    %1 = memref.load %arg1[%c1] : memref<5xf32, #tpu.memory_space<smem>>
    %c2 = arith.constant 2 : index
    %2 = memref.load %arg1[%c2] : memref<5xf32, #tpu.memory_space<smem>>
    %c3 = arith.constant 3 : index
    %3 = memref.load %arg1[%c3] : memref<5xf32, #tpu.memory_space<smem>>
    %c4 = arith.constant 4 : index
    %4 = memref.load %arg1[%c4] : memref<5xf32, #tpu.memory_space<smem>>
    %c0_0 = arith.constant 0 : index
    %c0_1 = arith.constant 0 : index
    %5 = vector.load %arg2[%c0_0, %c0_1] : memref<16x128xf32, #tpu.memory_space<vmem>>, vector<16x128xf32>
    %6 = vector.broadcast %1 : f32 to vector<16x128xf32>
    %7 = arith.mulf %6, %5 : vector<16x128xf32>
    %8 = math.absf %7 : vector<16x128xf32>
    %cst = arith.constant 0.000000e+00 : f32
    %9 = vector.broadcast %cst : f32 to vector<16x128xf32>
    %10 = arith.cmpf oeq, %8, %9 : vector<16x128xf32>
    %cst_2 = arith.constant 1.000000e+00 : f32
    %11 = vector.broadcast %cst_2 : f32 to vector<16x128xf32>
    %12 = arith.select %10, %11, %8 : vector<16x128xi1>, vector<16x128xf32>
    %13 = math.log %12 : vector<16x128xf32>
    %14 = vector.broadcast %2 : f32 to vector<16x128xf32>
    %15 = arith.mulf %14, %13 : vector<16x128xf32>
    %16 = math.exp %15 : vector<16x128xf32>
    %17 = vector.broadcast %4 : f32 to vector<16x128xf32>
    %18 = arith.select %10, %17, %16 : vector<16x128xi1>, vector<16x128xf32>
    %19 = math.log1p %18 : vector<16x128xf32>
    %20 = vector.broadcast %3 : f32 to vector<16x128xf32>
    %21 = arith.mulf %20, %19 : vector<16x128xf32>
    %22 = math.exp %21 : vector<16x128xf32>
    %cst_3 = arith.constant 1.000000e-07 : f32
    %23 = vector.broadcast %cst_3 : f32 to vector<16x128xf32>
    %24 = arith.addf %22, %23 : vector<16x128xf32>
    %25 = tpu.reciprocal %24 {approx = true} : vector<16x128xf32> -> vector<16x128xf32>
    %26 = arith.mulf %24, %25 : vector<16x128xf32>
    %cst_4 = arith.constant 2.000000e+00 : f32
    %27 = vector.broadcast %cst_4 : f32 to vector<16x128xf32>
    %28 = arith.subf %27, %26 : vector<16x128xf32>
    %29 = arith.mulf %25, %28 : vector<16x128xf32>
    %30 = vector.broadcast %0 : f32 to vector<16x128xf32>
    %31 = arith.mulf %30, %5 : vector<16x128xf32>
    %32 = arith.mulf %31, %29 : vector<16x128xf32>
    %c0_5 = arith.constant 0 : index
    %c0_6 = arith.constant 0 : index
    %33 = vector.load %arg3[%c0_5, %c0_6] : memref<16x128xf32, #tpu.memory_space<vmem>>, vector<16x128xf32>
    tpu.vector_store %arg3[%c0_5, %c0_6], %32 {strides = array<i32>} : memref<16x128xf32, #tpu.memory_space<vmem>>, vector<16x128xf32>,
    return
  }
  func.func @transform_0(%arg0: i32) -> i32 {
    %c0_i32 = arith.constant 0 : i32
    %c0_i32_0 = arith.constant 0 : i32
    return %c0_i32 : i32
  }
  func.func @transform_1(%arg0: i32) -> (i32, i32) {
    %c0_i32 = arith.constant 0 : i32
    %c0_i32_0 = arith.constant 0 : i32
    return %arg0, %c0_i32 : i32, i32
  }
  func.func @transform_2(%arg0: i32) -> (i32, i32) {
    %c0_i32 = arith.constant 0 : i32
    %c0_i32_0 = arith.constant 0 : i32
    return %arg0, %c0_i32 : i32, i32
  }
}

</mosaic_0001>

<llo_original>
// kernel: tpu_custom_call.1
$region0: #{tpu_custom_call.1}
  #allocation0 [shape = 'u32[]', space=smem, size = 0x4, offset = 0x4, fixed_abs, tag = 'smem constant byte address 0x4 - core index']
  #allocation1 [shape = 'u32[144,128]{1,0:T(1,128)}', space=vmem, size = 0x12000, scoped, tag = 'internal scratch']
  %s0 = inlined_call_operand.hbm [shape: f32[5], index: 0, kind: input, shape index: {}]
  %s1 = inlined_call_operand.hbm [shape: f32[16,128], index: 1, kind: input, shape index: {}]
  %s2 = inlined_call_operand.hbm [shape: f32[16,128], index: 2, kind: output, shape index: {}]
  %s3 = sld [smem:[#allocation0]]
  $region26: #{tpu_custom_call.1} parent=0
    _
  %s5 = ssub.s32 1, %s3
  %s6 = scalar_select 0, %s5, %s3
  $region1: #{tpu_custom_call.1} parent=0
    #allocation2 [shape = 'u8[512]{0}', space=smem, size = 0x200, scoped, tag = 'input window, operand 0, single buffered']
    #allocation3 [shape = 's32[1]{0}', space=sflag, size = 0x4, scoped, tag = 'scoped memory for tpu_custom_call.1']
    #allocation4 [shape = 's32[1]{0}', space=sflag, size = 0x4, scoped, tag = 'scoped memory for tpu_custom_call.1']
    #allocation5 [shape = 's32[1]{0}', space=sflag, size = 0x4, scoped, tag = 'scoped memory for tpu_custom_call.1']
    #allocation6 [shape = 'u8[8192]{0}', space=vmem, size = 0x2000, scoped, tag = 'input window, operand 1, single buffered']
    #allocation7 [shape = 'u8[8192]{0}', space=vmem, size = 0x2000, scoped, tag = 'output window, operand 0, single buffered']
    %7 = vsyncpa [#allocation5], 0
    %8 = vsyncpa [#allocation3], 0
    %9 = vsyncpa [#allocation4], 0
    // Predicated region
    $region2: #{tpu_custom_call.1} parent=1 // pred_check
      _
    $region3: #{tpu_custom_call.1} parent=1 // pred_check_branch
      %11 = sbr.rel (0) target = $region5
    $region4: #{tpu_custom_call.1} parent=1 // pred_region
      %s13 = ssub.s32 16, 16
      %14 = vsyncadd [#allocation5], %s13
      %17 = dma.hbm_to_smem %s0, 16, [#allocation2], [#allocation5]
    $region5: #{tpu_custom_call.1} parent=1 // pred_fallthru
      _
    // Predicated region
    $region6: #{tpu_custom_call.1} parent=1 // pred_check
      _
    $region7: #{tpu_custom_call.1} parent=1 // pred_check_branch
      %19 = sbr.rel (0) target = $region9
    $region8: #{tpu_custom_call.1} parent=1 // pred_region
      %s21 = ssub.s32 256, 256
      %22 = vsyncadd [#allocation3], %s21
      %s23 = sshll.u32 [#allocation6], 4
      %s24 = int_to_ptr.vmem [resolvable:$true] %s23
      %29 = dma.hbm_to_vmem [thread:$0]  %s1, 256, %s24, [#allocation3], 128, 128, 8
    $region9: #{tpu_custom_call.1} parent=1 // pred_fallthru
      _
    // Predicated region
    $region10: #{tpu_custom_call.1} parent=1 // pred_check
      _
    $region11: #{tpu_custom_call.1} parent=1 // pred_check_branch
      %31 = sbr.rel (0) target = $region13
    $region12: #{tpu_custom_call.1} parent=1 // pred_region
      %32 = dma.done [#allocation5], 16
    $region13: #{tpu_custom_call.1} parent=1 // pred_fallthru
      _
    // Predicated region
    $region14: #{tpu_custom_call.1} parent=1 // pred_check
      _
    $region15: #{tpu_custom_call.1} parent=1 // pred_check_branch
      %34 = sbr.rel (0) target = $region17
    $region16: #{tpu_custom_call.1} parent=1 // pred_region
      %35 = dma.done [#allocation3], 256
    $region17: #{tpu_custom_call.1} parent=1 // pred_fallthru
      _
    %36 = sfence
    %s37 = sld [smem:[#allocation2]]
    %s38 = sld [smem:[#allocation2 + $0x1]]
    %s39 = sld [smem:[#allocation2 + $0x2]]
    %s40 = sld [smem:[#allocation2 + $0x3]]
    %s41 = sld [smem:[#allocation2 + $0x4]]
    %v42 = vld [vmem:[#allocation6] sm:$0xff]
    %v43 = vld [vmem:[#allocation6 + $0x8] sm:$0xff]
    %v44 = vstv %s38
    %v45 = vmul.f32 %v44, %v42
    %v46 = vmul.f32 %v44, %v43
    %v47 = vand.u32 2147483647, %v45
    %v48 = vand.u32 2147483647, %v46
    %vm49 = vcmp.eq.f32.partialorder %v47, 0.0
    %vm50 = vcmp.eq.f32.partialorder %v48, 0.0
    %v51 = vsel %vm49, 1.0, %v47
    %v52 = vsel %vm50, 1.0, %v48
    %v53 = vlog2.pop %v51
    %v54 = vmul.f32 %v53, 0.6931472
    %v55 = vlog2.pop %v52
    %v56 = vmul.f32 %v55, 0.6931472
    %v57 = vstv %s39
    %v58 = vmul.f32 %v57, %v54
    %v59 = vmul.f32 %v57, %v56
    %v60 = vmul.f32 %v58, 1.442695
    %v61 = vpow.pop %v60
    %v62 = vmul.f32 %v59, 1.442695
    %v63 = vpow.pop %v62
    %v64 = vstv %s41
    %v65 = vsel %vm49, %v64, %v61
    %v66 = vsel %vm50, %v64, %v63
    %v67 = vadd.f32 %v65, 1.0
    %v68 = vlog2.pop %v67
    %v69 = vmul.f32 %v68, 0.6931472
    %v70 = vmul.f32 -0.5, %v65
    %v71 = vadd.f32 %v70, 1.0
    %v72 = vmul.f32 %v71, %v65
    %v73 = vand.u32 2147483647, %v65
    %vm74 = vcmp.lt.f32.partialorder %v73, 0.0004427343
    %v75 = vsel %vm74, %v72, %v69
    %v76 = vadd.f32 %v66, 1.0
    %v77 = vlog2.pop %v76
    %v78 = vmul.f32 %v77, 0.6931472
    %v79 = vmul.f32 -0.5, %v66
    %v80 = vadd.f32 %v79, 1.0
    %v81 = vmul.f32 %v80, %v66
    %v82 = vand.u32 2147483647, %v66
    %vm83 = vcmp.lt.f32.partialorder %v82, 0.0004427343
    %v84 = vsel %vm83, %v81, %v78
    %v85 = vstv %s40
    %v86 = vmul.f32 %v85, %v75
    %v87 = vmul.f32 %v85, %v84
    %v88 = vmul.f32 %v86, 1.442695
    %v89 = vpow.pop %v88
    %v90 = vmul.f32 %v87, 1.442695
    %v91 = vpow.pop %v90
    %v92 = vadd.f32 %v89, 1e-07
    %v93 = vadd.f32 %v91, 1e-07
    %v94 = vrcp.pop %v92
    %v95 = vrcp.pop %v93
    %v96 = vmul.f32 %v92, %v94
    %v97 = vmul.f32 %v93, %v95
    %v98 = vsub.f32 2.0, %v96
    %v99 = vsub.f32 2.0, %v97
    %v100 = vmul.f32 %v94, %v98
    %v101 = vmul.f32 %v95, %v99
    %v102 = vstv %s37
    %v103 = vmul.f32 %v102, %v42
    %v104 = vmul.f32 %v102, %v43
    %v105 = vmul.f32 %v103, %v100
    %v106 = vmul.f32 %v104, %v101
    %107 = vst [vmem:[#allocation7] sm:$0xff] %v105
    %108 = vst [vmem:[#allocation7 + $0x8] sm:$0xff] %v106
    // Predicated region
    $region18: #{tpu_custom_call.1} parent=1 // pred_check
      _
    $region19: #{tpu_custom_call.1} parent=1 // pred_check_branch
      %110 = sbr.rel (0) target = $region21
    $region20: #{tpu_custom_call.1} parent=1 // pred_region
      %s112 = ssub.s32 256, 256
      %113 = vsyncadd [#allocation4], %s112
      %s114 = sshll.u32 [#allocation7], 4
      %s115 = int_to_ptr.vmem [resolvable:$true] %s114
      %120 = dma.vmem_to_hbm [thread:$0]  %s115, 256, %s2, [#allocation4], 128, 128, 8
    $region21: #{tpu_custom_call.1} parent=1 // pred_fallthru
      _
    // Predicated region
    $region22: #{tpu_custom_call.1} parent=1 // pred_check
      _
    $region23: #{tpu_custom_call.1} parent=1 // pred_check_branch
      %122 = sbr.rel (0) target = $region25
    $region24: #{tpu_custom_call.1} parent=1 // pred_region
      %123 = dma.done [#allocation4], 256
    $region25: #{tpu_custom_call.1} parent=1 // pred_fallthru
      _
    %124 = vsyncpa [#allocation3], 1
    %125 = vsyncpa [#allocation4], 1
    %126 = vsyncpa [#allocation5], 1

</llo_original>
